<compile_context>
chip_gen: v7x
topology: tpu7x:2x2x1
jax: 0.10.0
libtpu: 0.0.40
codegen_flags: <defaults>
</compile_context>

<pallas_src>
import numpy as np

import jax
import jax.numpy as jnp
from jax.experimental import pallas as pl
from jax.experimental.pallas import tpu as pltpu

# ---------------- model hyper-parameters -------------------------------------
FEATURE_LENGTH = 8
SEQ = 8
BASE_LEN = 16
SEQ_FEAT_DIM = 32                      # SeqFeature.features_dim
BASE_FEAT_DIM = 32                     # BaseFeature.features_dim
DIM1 = SEQ_FEAT_DIM + BASE_FEAT_DIM    # CombinedModel.features_dim = 64
DIM2 = DIM1 // 2                       # 32
BATCH = 2

OBS_FLAT = SEQ * FEATURE_LENGTH        # 64

# ---------------- packed-parameter slab layout --------------------------------
# All row offsets are multiples of 8; every block spans the full 128 lanes.
_R_WSEQ = 0                       # rows   0.. 63 : W_seq  [64,128]  (cols  0:32)
_R_WBASE = _R_WSEQ + OBS_FLAT     # rows  64.. 79 : W_base [16,128]  (cols 32:64)
_R_W1 = _R_WBASE + BASE_LEN       # rows  80..207 : agg W1 [128,128] (rows 0:64, cols 0:32)
_R_W2 = _R_W1 + 128               # rows 208..335 : agg W2 [128,128] (rows 0:32, cols 0:32)
_R_BEXT = _R_W2 + 128             # rows 336..343 : [b_seq|b_base] replicated x8
_R_B1 = _R_BEXT + 8               # rows 344..351 : b1 replicated x8
_R_B2 = _R_B1 + 8                 # rows 352..359 : b2 replicated x8 (+1.0 carrier @ col 32)
_R_W3 = _R_B2 + 8                 # rows 360..367 : w3 row replicated x8 (+b3 @ col 32)
SLAB_ROWS = _R_W3 + 8             # 368
SLAB_COLS = 128


def _bias_rows(slab_ref, row0, batch):
    """Bias rows are pre-replicated across the 8 sublanes of their tile, so for
    batch <= 8 the `+ bias` is a plain element-wise vadd (no sublane broadcast)."""
    if batch <= 8:
        return slab_ref[row0:row0 + batch, :]           # [B, 128]
    return slab_ref[row0:row0 + 1, :]                   # [1, 128] -> jnp broadcast


# ---------------- Pallas kernel: the full fused forward pass -----------------
def outter_kernel(obs_ref, base_ref, slab_ref, out_ref):
    obs = obs_ref[...]                                   # [B, 64]
    base = base_ref[...]                                 # [B, 16]
    b = obs.shape[0]

    # Static, tile-aligned, lane-dense views into the packed parameter slab.
    w_seq = slab_ref[_R_WSEQ:_R_WBASE, :]                # [64, 128]
    w_base = slab_ref[_R_WBASE:_R_W1, :]                 # [16, 128]
    w1 = slab_ref[_R_W1:_R_W2, :]                        # [128, 128]
    w2 = slab_ref[_R_W2:_R_BEXT, :]                      # [128, 128]

    b_ext = _bias_rows(slab_ref, _R_BEXT, b)             # [B, 128]
    b1 = _bias_rows(slab_ref, _R_B1, b)                  # [B, 128]
    b2 = _bias_rows(slab_ref, _R_B2, b)                  # [B, 128] (col 32 == 1.0)
    w3 = _bias_rows(slab_ref, _R_W3, b)                  # [B, 128] (col 32 == b3)

    # Fused SeqFeature + BaseFeature: two MXU pushes summed (block-diag packing)
    # == concat(seq_feat, base_feat); padded lanes 64:128 stay exactly 0.
    feat = jnp.maximum(
        jnp.dot(obs, w_seq, preferred_element_type=jnp.float32)
        + jnp.dot(base, w_base, preferred_element_type=jnp.float32)
        + b_ext, 0.0)
    # agg[0]: Linear(64, 32) + ReLU (lanes 32:128 stay 0)
    h1 = jnp.maximum(
        jnp.dot(feat, w1, preferred_element_type=jnp.float32) + b1, 0.0)
    # agg[2]: Linear(32, 32) + ReLU; lane 32 becomes the constant-1 bias carrier
    h2 = jnp.maximum(
        jnp.dot(h1, w2, preferred_element_type=jnp.float32) + b2, 0.0)
    # agg[4]: Linear(32, 1) as VPU mul + XLU lane reduce; final bias is folded
    # in via h2[:, 32] == 1 and w3[:, 32] == b3.
    out_ref[...] = jnp.sum(h2 * w3, axis=-1, keepdims=True)


_VMEM_SPEC = pl.BlockSpec(memory_space=pltpu.MemorySpace.VMEM)


@jax.jit
def outter_model_forward(obs, base, slab):
    """obs: [B, seq, feature_length] f32, base: [B, base_len] f32 -> [B, 1] f32."""
    B = obs.shape[0]
    obs_flat = obs.reshape(B, OBS_FLAT)   # metadata-only reshape, no extra dispatch
    flops = 2 * B * (OBS_FLAT * DIM1 + BASE_LEN * DIM1 + DIM1 * DIM2
                     + DIM2 * DIM2 + DIM2)
    bytes_accessed = 4 * (SLAB_ROWS * SLAB_COLS + B * OBS_FLAT + B * BASE_LEN + B)
    return pl.pallas_call(
        outter_kernel,
        out_shape=jax.ShapeDtypeStruct((B, 1), jnp.float32),
        in_specs=[_VMEM_SPEC, _VMEM_SPEC, _VMEM_SPEC],
        out_specs=_VMEM_SPEC,
        cost_estimate=pl.CostEstimate(flops=int(flops), transcendentals=0,
                                      bytes_accessed=int(bytes_accessed)),
    )(obs_flat, base, slab)


# ---------------- parameter init (PyTorch-style uniform) + one-time packing --
def init_params(key):
    def linear(key, fan_in, fan_out):
        kw, kb = jax.random.split(key)
        bound = 1.0 / jnp.sqrt(fan_in)
        w = jax.random.uniform(kw, (fan_in, fan_out), jnp.float32, -bound, bound)
        b = jax.random.uniform(kb, (1, fan_out), jnp.float32, -bound, bound)
        return w, b

    k = jax.random.split(key, 5)
    w_seq, b_seq = linear(k[0], OBS_FLAT, SEQ_FEAT_DIM)
    w_base, b_base = linear(k[1], BASE_LEN, BASE_FEAT_DIM)
    w1, b1 = linear(k[2], DIM1, DIM2)
    w2, b2 = linear(k[3], DIM2, DIM2)
    w3, b3 = linear(k[4], DIM2, 1)
    return (w_seq, b_seq, w_base, b_base, w1, b1, w2, b2, w3, b3)


def pack_params(params):
    """Build the single [368, 128] f32 parameter slab (done once, outside jit)."""
    (w_seq, b_seq, w_base, b_base, w1, b1, w2, b2, w3, b3) = [
        np.asarray(p, np.float32) for p in params]
    slab = np.zeros((SLAB_ROWS, SLAB_COLS), np.float32)
    # Block-diagonal fused extractor weights (lane-dense, zero-padded).
    slab[_R_WSEQ:_R_WSEQ + OBS_FLAT, 0:SEQ_FEAT_DIM] = w_seq
    slab[_R_WBASE:_R_WBASE + BASE_LEN, SEQ_FEAT_DIM:DIM1] = w_base
    # agg weights, zero-padded to full [128, 128] tiles.
    slab[_R_W1:_R_W1 + DIM1, 0:DIM2] = w1
    slab[_R_W2:_R_W2 + DIM2, 0:DIM2] = w2
    # Bias tiles, replicated across all 8 sublanes (element-wise add in-kernel).
    slab[_R_BEXT:_R_BEXT + 8, 0:SEQ_FEAT_DIM] = b_seq.reshape(1, -1)
    slab[_R_BEXT:_R_BEXT + 8, SEQ_FEAT_DIM:DIM1] = b_base.reshape(1, -1)
    slab[_R_B1:_R_B1 + 8, 0:DIM2] = b1.reshape(1, -1)
    slab[_R_B2:_R_B2 + 8, 0:DIM2] = b2.reshape(1, -1)
    slab[_R_B2:_R_B2 + 8, DIM2] = 1.0                    # constant-1 carrier lane
    slab[_R_W3:_R_W3 + 8, 0:DIM2] = w3.reshape(1, -1)    # [32,1] -> row
    slab[_R_W3:_R_W3 + 8, DIM2] = float(b3.reshape(-1)[0])   # fold final bias
    return jnp.asarray(slab)


# ---------------- pure-JAX reference for sanity ------------------------------
def reference(obs, base, params):
    (w_seq, b_seq, w_base, b_base, w1, b1, w2, b2, w3, b3) = params
    sf = jnp.maximum(obs.reshape(obs.shape[0], -1) @ w_seq + b_seq, 0.0)
    bf = jnp.maximum(base @ w_base + b_base, 0.0)
    h = jnp.concatenate([sf, bf], axis=1)
    h = jnp.maximum(h @ w1 + b1, 0.0)
    h = jnp.maximum(h @ w2 + b2, 0.0)
    return h @ w3 + b3


if __name__ == "__main__":
    key = jax.random.PRNGKey(0)
    k_obs, k_base, k_params = jax.random.split(key, 3)

    obs = jax.random.normal(k_obs, (BATCH, SEQ, FEATURE_LENGTH), jnp.float32)
    base = jax.random.normal(k_base, (BATCH, BASE_LEN), jnp.float32)
    params = init_params(k_params)
    slab = pack_params(params)            # one-time parameter preprocessing

    out = outter_model_forward(obs, base, slab)
    out = jax.block_until_ready(out)

    ref = reference(obs, base, params)
    assert out.shape == (BATCH, 1), out.shape
    assert jnp.allclose(out, ref, atol=1e-4, rtol=1e-4), (out, ref)
    print("KERNEL_OK")
</pallas_src>

<mosaic_0001>
module attributes {stable_mosaic.version = 11 : i64} {
  func.func @outter_kernel(%arg0: memref<2x64xf32, #tpu.memory_space<vmem>>, %arg1: memref<2x16xf32, #tpu.memory_space<vmem>>, %arg2: memref<368x128xf32, #tpu.memory_space<vmem>>, %arg3: memref<2x1xf32, #tpu.memory_space<vmem>>) attributes {dimension_semantics = [], scalar_prefetch = 0 : i64, scratch_operands = 0 : i64, tpu.core_type = #tpu.core_type<tc>} {
    %c0 = arith.constant 0 : index
    %c0_0 = arith.constant 0 : index
    %0 = vector.load %arg0[%c0, %c0_0] : memref<2x64xf32, #tpu.memory_space<vmem>>, vector<2x64xf32>
    %c0_1 = arith.constant 0 : index
    %c0_2 = arith.constant 0 : index
    %1 = vector.load %arg1[%c0_1, %c0_2] : memref<2x16xf32, #tpu.memory_space<vmem>>, vector<2x16xf32>
    %c0_3 = arith.constant 0 : index
    %c0_4 = arith.constant 0 : index
    %2 = vector.load %arg2[%c0_3, %c0_4] : memref<368x128xf32, #tpu.memory_space<vmem>>, vector<64x128xf32>
    %c64 = arith.constant 64 : index
    %c0_5 = arith.constant 0 : index
    %3 = vector.load %arg2[%c64, %c0_5] : memref<368x128xf32, #tpu.memory_space<vmem>>, vector<16x128xf32>
    %c80 = arith.constant 80 : index
    %c0_6 = arith.constant 0 : index
    %4 = vector.load %arg2[%c80, %c0_6] : memref<368x128xf32, #tpu.memory_space<vmem>>, vector<128x128xf32>
    %c208 = arith.constant 208 : index
    %c0_7 = arith.constant 0 : index
    %5 = vector.load %arg2[%c208, %c0_7] : memref<368x128xf32, #tpu.memory_space<vmem>>, vector<128x128xf32>
    %c336 = arith.constant 336 : index
    %c0_8 = arith.constant 0 : index
    %6 = vector.load %arg2[%c336, %c0_8] : memref<368x128xf32, #tpu.memory_space<vmem>>, vector<2x128xf32>
    %c344 = arith.constant 344 : index
    %c0_9 = arith.constant 0 : index
    %7 = vector.load %arg2[%c344, %c0_9] : memref<368x128xf32, #tpu.memory_space<vmem>>, vector<2x128xf32>
    %c352 = arith.constant 352 : index
    %c0_10 = arith.constant 0 : index
    %8 = vector.load %arg2[%c352, %c0_10] : memref<368x128xf32, #tpu.memory_space<vmem>>, vector<2x128xf32>
    %c360 = arith.constant 360 : index
    %c0_11 = arith.constant 0 : index
    %9 = vector.load %arg2[%c360, %c0_11] : memref<368x128xf32, #tpu.memory_space<vmem>>, vector<2x128xf32>
    %cst = arith.constant dense<0.000000e+00> : vector<2x128xf32>
    %10 = tpu.matmul %0, %2, %cst {dimension_numbers = #tpu.dot_dimension_numbers<[1], [0], [0], [1], [0, 0, 1, 1], [], []>} : vector<2x64xf32>, vector<64x128xf32>, vector<2x128xf32> -> vector<2x128xf32>
    %cst_12 = arith.constant dense<0.000000e+00> : vector<2x128xf32>
    %11 = tpu.matmul %1, %3, %cst_12 {dimension_numbers = #tpu.dot_dimension_numbers<[1], [0], [0], [1], [0, 0, 1, 1], [], []>} : vector<2x16xf32>, vector<16x128xf32>, vector<2x128xf32> -> vector<2x128xf32>
    %12 = arith.addf %10, %11 : vector<2x128xf32>
    %13 = arith.addf %12, %6 : vector<2x128xf32>
    %cst_13 = arith.constant 0.000000e+00 : f32
    %14 = vector.broadcast %cst_13 : f32 to vector<2x128xf32>
    %15 = arith.maximumf %13, %14 : vector<2x128xf32>
    %cst_14 = arith.constant dense<0.000000e+00> : vector<2x128xf32>
    %16 = tpu.matmul %15, %4, %cst_14 {dimension_numbers = #tpu.dot_dimension_numbers<[1], [0], [0], [1], [0, 0, 1, 1], [], []>} : vector<2x128xf32>, vector<128x128xf32>, vector<2x128xf32> -> vector<2x128xf32>
    %17 = arith.addf %16, %7 : vector<2x128xf32>
    %cst_15 = arith.constant 0.000000e+00 : f32
    %18 = vector.broadcast %cst_15 : f32 to vector<2x128xf32>
    %19 = arith.maximumf %17, %18 : vector<2x128xf32>
    %cst_16 = arith.constant dense<0.000000e+00> : vector<2x128xf32>
    %20 = tpu.matmul %19, %5, %cst_16 {dimension_numbers = #tpu.dot_dimension_numbers<[1], [0], [0], [1], [0, 0, 1, 1], [], []>} : vector<2x128xf32>, vector<128x128xf32>, vector<2x128xf32> -> vector<2x128xf32>
    %21 = arith.addf %20, %8 : vector<2x128xf32>
    %cst_17 = arith.constant 0.000000e+00 : f32
    %22 = vector.broadcast %cst_17 : f32 to vector<2x128xf32>
    %23 = arith.maximumf %21, %22 : vector<2x128xf32>
    %24 = arith.mulf %23, %9 : vector<2x128xf32>
    %cst_18 = arith.constant dense<0.000000e+00> : vector<2xf32>
    %25 = vector.multi_reduction <add>, %24, %cst_18 [1] : vector<2x128xf32> to vector<2xf32>
    %26 = vector.shape_cast %25 : vector<2xf32> to vector<2x1xf32>
    %c0_19 = arith.constant 0 : index
    %c0_20 = arith.constant 0 : index
    %27 = vector.load %arg3[%c0_19, %c0_20] : memref<2x1xf32, #tpu.memory_space<vmem>>, vector<2x1xf32>
    tpu.vector_store %arg3[%c0_19, %c0_20], %26 {strides = array<i32>} : memref<2x1xf32, #tpu.memory_space<vmem>>, vector<2x1xf32>,
    return
  }
}

</mosaic_0001>

<llo_original>
// kernel: outter_model_forward.1
$region0: #{outter_model_forward.1}
  #allocation0 [shape = 'u32[]', space=smem, size = 0x4, offset = 0x4, fixed_abs, tag = 'smem constant byte address 0x4 - core index']
  #allocation1 [shape = 'u32[144,128]{1,0:T(1,128)}', space=vmem, size = 0x12000, scoped, tag = 'internal scratch']
  %s0 = inlined_call_operand.vmem [shape: f32[2,64], index: 0, kind: input, shape index: {}]
  %s1 = inlined_call_operand.vmem [shape: f32[2,16], index: 1, kind: input, shape index: {}]
  %s2 = inlined_call_operand.hbm [shape: f32[368,128], index: 2, kind: input, shape index: {}]
  %s3 = inlined_call_operand.vmem [shape: f32[2,1], index: 3, kind: output, shape index: {}]
  %s4 = sld [smem:[#allocation0]]
  $region26: #{outter_model_forward.1} parent=0
    _
  %s6 = ssub.s32 1, %s4
  %s7 = scalar_select 0, %s6, %s4
  $region1: #{outter_model_forward.1} parent=0
    #allocation2 [shape = 'u8[188416]{0}', space=vmem, size = 0x2e000, scoped, tag = 'input window, operand 2, single buffered']
    #allocation3 [shape = 's32[1]{0}', space=sflag, size = 0x4, scoped, tag = 'scoped memory for outter_model_forward.1']
    %8 = vsyncpa [#allocation3], 0
    // Predicated region
    $region2: #{outter_model_forward.1} parent=1 // pred_check
      _
    $region3: #{outter_model_forward.1} parent=1 // pred_check_branch
      %10 = sbr.rel (0) target = $region5
    $region4: #{outter_model_forward.1} parent=1 // pred_region
      _
    $region5: #{outter_model_forward.1} parent=1 // pred_fallthru
      _
    // Predicated region
    $region6: #{outter_model_forward.1} parent=1 // pred_check
      _
    $region7: #{outter_model_forward.1} parent=1 // pred_check_branch
      %12 = sbr.rel (0) target = $region9
    $region8: #{outter_model_forward.1} parent=1 // pred_region
      _
    $region9: #{outter_model_forward.1} parent=1 // pred_fallthru
      _
    // Predicated region
    $region10: #{outter_model_forward.1} parent=1 // pred_check
      _
    $region11: #{outter_model_forward.1} parent=1 // pred_check_branch
      %14 = sbr.rel (0) target = $region13
    $region12: #{outter_model_forward.1} parent=1 // pred_region
      %s16 = ssub.s32 5888, 5888
      %17 = vsyncadd [#allocation3], %s16
      %s18 = sshll.u32 [#allocation2], 4
      %s19 = int_to_ptr.vmem [resolvable:$true] %s18
      %24 = dma.hbm_to_vmem [thread:$0]  %s2, 5888, %s19, [#allocation3], 128, 128, 8
    $region13: #{outter_model_forward.1} parent=1 // pred_fallthru
      _
    // Predicated region
    $region14: #{outter_model_forward.1} parent=1 // pred_check
      _
    $region15: #{outter_model_forward.1} parent=1 // pred_check_branch
      %26 = sbr.rel (0) target = $region17
    $region16: #{outter_model_forward.1} parent=1 // pred_region
      %27 = dma.done [#allocation3], 5888
    $region17: #{outter_model_forward.1} parent=1 // pred_fallthru
      _
    %v28 = vld [vmem:[%s0] sm:$0x3]
    %v29 = vld [vmem:[%s1] sm:$0x3]
    %v30 = vld [vmem:[#allocation2] sm:$0xff]
    %v31 = vld [vmem:[#allocation2 + $0x8] sm:$0xff]
    %v32 = vld [vmem:[#allocation2 + $0x10] sm:$0xff]
    %v33 = vld [vmem:[#allocation2 + $0x18] sm:$0xff]
    %v34 = vld [vmem:[#allocation2 + $0x20] sm:$0xff]
    %v35 = vld [vmem:[#allocation2 + $0x28] sm:$0xff]
    %v36 = vld [vmem:[#allocation2 + $0x30] sm:$0xff]
    %v37 = vld [vmem:[#allocation2 + $0x38] sm:$0xff]
    %v38 = vld [vmem:[#allocation2 + $0x40] sm:$0xff]
    %v39 = vld [vmem:[#allocation2 + $0x48] sm:$0xff]
    %v40 = vld [vmem:[#allocation2 + $0x50] sm:$0xff]
    %v41 = vld [vmem:[#allocation2 + $0x58] sm:$0xff]
    %v42 = vld [vmem:[#allocation2 + $0x60] sm:$0xff]
    %v43 = vld [vmem:[#allocation2 + $0x68] sm:$0xff]
    %v44 = vld [vmem:[#allocation2 + $0x70] sm:$0xff]
    %v45 = vld [vmem:[#allocation2 + $0x78] sm:$0xff]
    %v46 = vld [vmem:[#allocation2 + $0x80] sm:$0xff]
    %v47 = vld [vmem:[#allocation2 + $0x88] sm:$0xff]
    %v48 = vld [vmem:[#allocation2 + $0x90] sm:$0xff]
    %v49 = vld [vmem:[#allocation2 + $0x98] sm:$0xff]
    %v50 = vld [vmem:[#allocation2 + $0xa0] sm:$0xff]
    %v51 = vld [vmem:[#allocation2 + $0xa8] sm:$0xff]
    %v52 = vld [vmem:[#allocation2 + $0xb0] sm:$0xff]
    %v53 = vld [vmem:[#allocation2 + $0xb8] sm:$0xff]
    %v54 = vld [vmem:[#allocation2 + $0xc0] sm:$0xff]
    %v55 = vld [vmem:[#allocation2 + $0xc8] sm:$0xff]
    %v56 = vld [vmem:[#allocation2 + $0xd0] sm:$0xff]
    %v57 = vld [vmem:[#allocation2 + $0xd8] sm:$0xff]
    %v58 = vld [vmem:[#allocation2 + $0xe0] sm:$0xff]
    %v59 = vld [vmem:[#allocation2 + $0xe8] sm:$0xff]
    %v60 = vld [vmem:[#allocation2 + $0xf0] sm:$0xff]
    %v61 = vld [vmem:[#allocation2 + $0xf8] sm:$0xff]
    %v62 = vld [vmem:[#allocation2 + $0x100] sm:$0xff]
    %v63 = vld [vmem:[#allocation2 + $0x108] sm:$0xff]
    %v64 = vld [vmem:[#allocation2 + $0x110] sm:$0xff]
    %v65 = vld [vmem:[#allocation2 + $0x118] sm:$0xff]
    %v66 = vld [vmem:[#allocation2 + $0x120] sm:$0xff]
    %v67 = vld [vmem:[#allocation2 + $0x128] sm:$0xff]
    %v68 = vld [vmem:[#allocation2 + $0x130] sm:$0xff]
    %v69 = vld [vmem:[#allocation2 + $0x138] sm:$0xff]
    %v70 = vld [vmem:[#allocation2 + $0x140] sm:$0xff]
    %v71 = vld [vmem:[#allocation2 + $0x148] sm:$0xff]
    %v72 = vld [vmem:[#allocation2 + $0x150] sm:$0x3]
    %v73 = vld [vmem:[#allocation2 + $0x158] sm:$0x3]
    %v74 = vld [vmem:[#allocation2 + $0x160] sm:$0x3]
    %v75 = vld [vmem:[#allocation2 + $0x168] sm:$0x3]
    %vm76 = vcmask 130048
    %v78 = vsel %vm76, %v29, 0
    %80 = vmatprep.subr.mxu0 0.0
    %81 = vmatpush1.msra.mxu0 %v38
    %82 = vmatprep.subr.mxu0 0.0
    %83 = vmatpush1.msra.mxu0 %v39
    %84 = vmatprep.subr.mxu0 0.0
    %85 = vmatpush1.msra.mxu0 0.0
    %86 = vmatprep.subr.mxu0 0.0
    %87 = vmatpush1.msra.mxu0 0.0
    %88 = vmatprep.subr.mxu0 0.0
    %89 = vmatpush1.msra.mxu0 0.0
    %90 = vmatprep.subr.mxu0 0.0
    %91 = vmatpush1.msra.mxu0 0.0
    %92 = vmatprep.subr.mxu0 0.0
    %93 = vmatpush1.msra.mxu0 0.0
    %94 = vmatprep.subr.mxu0 0.0
    %95 = vmatpush1.msra.mxu0 0.0
    %96 = vmatprep.subr.mxu0 0.0
    %97 = vmatpush1.msra.mxu0 0.0
    %98 = vmatprep.subr.mxu0 0.0
    %99 = vmatpush1.msra.mxu0 0.0
    %100 = vmatprep.subr.mxu0 0.0
    %101 = vmatpush1.msra.mxu0 0.0
    %102 = vmatprep.subr.mxu0 0.0
    %103 = vmatpush1.msra.mxu0 0.0
    %104 = vmatprep.subr.mxu0 0.0
    %105 = vmatpush1.msra.mxu0 0.0
    %106 = vmatprep.subr.mxu0 0.0
    %107 = vmatpush1.msra.mxu0 0.0
    %108 = vmatprep.subr.mxu0 0.0
    %109 = vmatpush1.msra.mxu0 0.0
    %110 = vmatprep.subr.mxu0 0.0
    %111 = vmatpush1.msra.mxu0 0.0
    %112 = vmatprep.subr.mxu0 0.0
    %113 = vmatpush1.msra.mxu0 0.0
    %114 = vmatprep.subr.mxu0 0.0
    %115 = vmatpush1.msra.mxu0 0.0
    %116 = vmatprep.subr.mxu0 0.0
    %117 = vmatpush1.msra.mxu0 0.0
    %118 = vmatprep.subr.mxu0 0.0
    %119 = vmatpush1.msra.mxu0 0.0
    %120 = vmatprep.subr.mxu0 0.0
    %121 = vmatpush1.msra.mxu0 0.0
    %122 = vmatprep.subr.mxu0 0.0
    %123 = vmatpush1.msra.mxu0 0.0
    %124 = vmatprep.subr.mxu0 0.0
    %125 = vmatpush1.msra.mxu0 0.0
    %126 = vmatprep.subr.mxu0 0.0
    %127 = vmatpush1.msra.mxu0 0.0
    %128 = vmatprep.subr.mxu0 0.0
    %129 = vmatpush1.msra.mxu0 0.0
    %130 = vmatprep.subr.mxu0 0.0
    %131 = vmatpush1.msra.mxu0 0.0
    %132 = vmatprep.subr.mxu0 0.0
    %133 = vmatpush1.msra.mxu0 0.0
    %134 = vmatprep.subr.mxu0 0.0
    %135 = vmatpush1.msra.mxu0 0.0
    %136 = vmatprep.subr.mxu0 0.0
    %137 = vmatpush1.msra.mxu0 0.0
    %138 = vmatprep.subr.mxu0 0.0
    %139 = vmatpush1.msra.mxu0 0.0
    %140 = vmatprep.subr.mxu0 0.0
    %141 = vmatpush1.msra.mxu0 0.0
    %142 = vmatprep.subr.mxu0 0.0
    %143 = vmatpush1.msra.mxu0 0.0
    %144 = vmatprep.mubr.f32.mxu0 0.0
    %145 = vmatmul.mubr.f32.gmra.mrb[0].mxu0 %v78
    %v146 = vpop.f32.mrb[0].mxu0
    %v147 = vadd.f32 0.0, %v146
    %v148 = vpop.f32.mrb[0].mxu0
    %149 = vdwg.mxu0
    %vm150 = vcmask 523264
    %v152 = vsel %vm150, %v28, 0
    %154 = vmatprep.subr.mxu0 0.0
    %155 = vmatpush1.msra.mxu0 %v30
    %156 = vmatprep.subr.mxu0 0.0
    %157 = vmatpush1.msra.mxu0 %v31
    %158 = vmatprep.subr.mxu0 0.0
    %159 = vmatpush1.msra.mxu0 %v32
    %160 = vmatprep.subr.mxu0 0.0
    %161 = vmatpush1.msra.mxu0 %v33
    %162 = vmatprep.subr.mxu0 0.0
    %163 = vmatpush1.msra.mxu0 %v34
    %164 = vmatprep.subr.mxu0 0.0
    %165 = vmatpush1.msra.mxu0 %v35
    %166 = vmatprep.subr.mxu0 0.0
    %167 = vmatpush1.msra.mxu0 %v36
    %168 = vmatprep.subr.mxu0 0.0
    %169 = vmatpush1.msra.mxu0 %v37
    %170 = vmatprep.subr.mxu0 0.0
    %171 = vmatpush1.msra.mxu0 0.0
    %172 = vmatprep.subr.mxu0 0.0
    %173 = vmatpush1.msra.mxu0 0.0
    %174 = vmatprep.subr.mxu0 0.0
    %175 = vmatpush1.msra.mxu0 0.0
    %176 = vmatprep.subr.mxu0 0.0
    %177 = vmatpush1.msra.mxu0 0.0
    %178 = vmatprep.subr.mxu0 0.0
    %179 = vmatpush1.msra.mxu0 0.0
    %180 = vmatprep.subr.mxu0 0.0
    %181 = vmatpush1.msra.mxu0 0.0
    %182 = vmatprep.subr.mxu0 0.0
    %183 = vmatpush1.msra.mxu0 0.0
    %184 = vmatprep.subr.mxu0 0.0
    %185 = vmatpush1.msra.mxu0 0.0
    %186 = vmatprep.subr.mxu0 0.0
    %187 = vmatpush1.msra.mxu0 0.0
    %188 = vmatprep.subr.mxu0 0.0
    %189 = vmatpush1.msra.mxu0 0.0
    %190 = vmatprep.subr.mxu0 0.0
    %191 = vmatpush1.msra.mxu0 0.0
    %192 = vmatprep.subr.mxu0 0.0
    %193 = vmatpush1.msra.mxu0 0.0
    %194 = vmatprep.subr.mxu0 0.0
    %195 = vmatpush1.msra.mxu0 0.0
    %196 = vmatprep.subr.mxu0 0.0
    %197 = vmatpush1.msra.mxu0 0.0
    %198 = vmatprep.subr.mxu0 0.0
    %199 = vmatpush1.msra.mxu0 0.0
    %200 = vmatprep.subr.mxu0 0.0
    %201 = vmatpush1.msra.mxu0 0.0
    %202 = vmatprep.subr.mxu0 0.0
    %203 = vmatpush1.msra.mxu0 0.0
    %204 = vmatprep.subr.mxu0 0.0
    %205 = vmatpush1.msra.mxu0 0.0
    %206 = vmatprep.subr.mxu0 0.0
    %207 = vmatpush1.msra.mxu0 0.0
    %208 = vmatprep.subr.mxu0 0.0
    %209 = vmatpush1.msra.mxu0 0.0
    %210 = vmatprep.subr.mxu0 0.0
    %211 = vmatpush1.msra.mxu0 0.0
    %212 = vmatprep.subr.mxu0 0.0
    %213 = vmatpush1.msra.mxu0 0.0
    %214 = vmatprep.subr.mxu0 0.0
    %215 = vmatpush1.msra.mxu0 0.0
    %216 = vmatprep.subr.mxu0 0.0
    %217 = vmatpush1.msra.mxu0 0.0
    %218 = vmatprep.mubr.f32.mxu0 0.0
    %219 = vmatmul.mubr.f32.gmra.mrb[0].mxu0 %v152
    %v220 = vpop.f32.mrb[0].mxu0
    %v221 = vadd.f32 %v147, %v220
    %v222 = vpop.f32.mrb[0].mxu0
    %223 = vdwg.mxu0
    %v224 = vadd.f32 %v221, %v72
    %v225 = vmax.f32 %v224, 0.0
    %226 = vmatprep.subr.mxu0 0.0
    %227 = vmatpush1.msra.mxu0 %v40
    %228 = vmatprep.subr.mxu0 0.0
    %229 = vmatpush1.msra.mxu0 %v41
    %230 = vmatprep.subr.mxu0 0.0
    %231 = vmatpush1.msra.mxu0 %v42
    %232 = vmatprep.subr.mxu0 0.0
    %233 = vmatpush1.msra.mxu0 %v43
    %234 = vmatprep.subr.mxu0 0.0
    %235 = vmatpush1.msra.mxu0 %v44
    %236 = vmatprep.subr.mxu0 0.0
    %237 = vmatpush1.msra.mxu0 %v45
    %238 = vmatprep.subr.mxu0 0.0
    %239 = vmatpush1.msra.mxu0 %v46
    %240 = vmatprep.subr.mxu0 0.0
    %241 = vmatpush1.msra.mxu0 %v47
    %242 = vmatprep.subr.mxu0 0.0
    %243 = vmatpush1.msra.mxu0 %v48
    %244 = vmatprep.subr.mxu0 0.0
    %245 = vmatpush1.msra.mxu0 %v49
    %246 = vmatprep.subr.mxu0 0.0
    %247 = vmatpush1.msra.mxu0 %v50
    %248 = vmatprep.subr.mxu0 0.0
    %249 = vmatpush1.msra.mxu0 %v51
    %250 = vmatprep.subr.mxu0 0.0
    %251 = vmatpush1.msra.mxu0 %v52
    %252 = vmatprep.subr.mxu0 0.0
    %253 = vmatpush1.msra.mxu0 %v53
    %254 = vmatprep.subr.mxu0 0.0
    %255 = vmatpush1.msra.mxu0 %v54
    %256 = vmatprep.subr.mxu0 0.0
    %257 = vmatpush1.msra.mxu0 %v55
    %258 = vmatprep.subr.mxu0 0.0
    %259 = vmatpush1.msra.mxu0 0.0
    %260 = vmatprep.subr.mxu0 0.0
    %261 = vmatpush1.msra.mxu0 0.0
    %262 = vmatprep.subr.mxu0 0.0
    %263 = vmatpush1.msra.mxu0 0.0
    %264 = vmatprep.subr.mxu0 0.0
    %265 = vmatpush1.msra.mxu0 0.0
    %266 = vmatprep.subr.mxu0 0.0
    %267 = vmatpush1.msra.mxu0 0.0
    %268 = vmatprep.subr.mxu0 0.0
    %269 = vmatpush1.msra.mxu0 0.0
    %270 = vmatprep.subr.mxu0 0.0
    %271 = vmatpush1.msra.mxu0 0.0
    %272 = vmatprep.subr.mxu0 0.0
    %273 = vmatpush1.msra.mxu0 0.0
    %274 = vmatprep.subr.mxu0 0.0
    %275 = vmatpush1.msra.mxu0 0.0
    %276 = vmatprep.subr.mxu0 0.0
    %277 = vmatpush1.msra.mxu0 0.0
    %278 = vmatprep.subr.mxu0 0.0
    %279 = vmatpush1.msra.mxu0 0.0
    %280 = vmatprep.subr.mxu0 0.0
    %281 = vmatpush1.msra.mxu0 0.0
    %282 = vmatprep.subr.mxu0 0.0
    %283 = vmatpush1.msra.mxu0 0.0
    %284 = vmatprep.subr.mxu0 0.0
    %285 = vmatpush1.msra.mxu0 0.0
    %286 = vmatprep.subr.mxu0 0.0
    %287 = vmatpush1.msra.mxu0 0.0
    %288 = vmatprep.subr.mxu0 0.0
    %289 = vmatpush1.msra.mxu0 0.0
    %290 = vmatprep.mubr.f32.mxu0 0.0
    %291 = vmatmul.mubr.f32.gmra.mrb[0].mxu0 %v225
    %v292 = vpop.f32.mrb[0].mxu0
    %v293 = vadd.f32 %v73, %v292
    %v294 = vpop.f32.mrb[0].mxu0
    %295 = vdwg.mxu0
    %v296 = vmax.f32 %v293, 0.0
    %297 = vmatprep.subr.mxu0 0.0
    %298 = vmatpush1.msra.mxu0 %v56
    %299 = vmatprep.subr.mxu0 0.0
    %300 = vmatpush1.msra.mxu0 %v57
    %301 = vmatprep.subr.mxu0 0.0
    %302 = vmatpush1.msra.mxu0 %v58
    %303 = vmatprep.subr.mxu0 0.0
    %304 = vmatpush1.msra.mxu0 %v59
    %305 = vmatprep.subr.mxu0 0.0
    %306 = vmatpush1.msra.mxu0 %v60
    %307 = vmatprep.subr.mxu0 0.0
    %308 = vmatpush1.msra.mxu0 %v61
    %309 = vmatprep.subr.mxu0 0.0
    %310 = vmatpush1.msra.mxu0 %v62
    %311 = vmatprep.subr.mxu0 0.0
    %312 = vmatpush1.msra.mxu0 %v63
    %313 = vmatprep.subr.mxu0 0.0
    %314 = vmatpush1.msra.mxu0 %v64
    %315 = vmatprep.subr.mxu0 0.0
    %316 = vmatpush1.msra.mxu0 %v65
    %317 = vmatprep.subr.mxu0 0.0
    %318 = vmatpush1.msra.mxu0 %v66
    %319 = vmatprep.subr.mxu0 0.0
    %320 = vmatpush1.msra.mxu0 %v67
    %321 = vmatprep.subr.mxu0 0.0
    %322 = vmatpush1.msra.mxu0 %v68
    %323 = vmatprep.subr.mxu0 0.0
    %324 = vmatpush1.msra.mxu0 %v69
    %325 = vmatprep.subr.mxu0 0.0
    %326 = vmatpush1.msra.mxu0 %v70
    %327 = vmatprep.subr.mxu0 0.0
    %328 = vmatpush1.msra.mxu0 %v71
    %329 = vmatprep.subr.mxu0 0.0
    %330 = vmatpush1.msra.mxu0 0.0
    %331 = vmatprep.subr.mxu0 0.0
    %332 = vmatpush1.msra.mxu0 0.0
    %333 = vmatprep.subr.mxu0 0.0
    %334 = vmatpush1.msra.mxu0 0.0
    %335 = vmatprep.subr.mxu0 0.0
    %336 = vmatpush1.msra.mxu0 0.0
    %337 = vmatprep.subr.mxu0 0.0
    %338 = vmatpush1.msra.mxu0 0.0
    %339 = vmatprep.subr.mxu0 0.0
    %340 = vmatpush1.msra.mxu0 0.0
    %341 = vmatprep.subr.mxu0 0.0
    %342 = vmatpush1.msra.mxu0 0.0
    %343 = vmatprep.subr.mxu0 0.0
    %344 = vmatpush1.msra.mxu0 0.0
    %345 = vmatprep.subr.mxu0 0.0
    %346 = vmatpush1.msra.mxu0 0.0
    %347 = vmatprep.subr.mxu0 0.0
    %348 = vmatpush1.msra.mxu0 0.0
    %349 = vmatprep.subr.mxu0 0.0
    %350 = vmatpush1.msra.mxu0 0.0
    %351 = vmatprep.subr.mxu0 0.0
    %352 = vmatpush1.msra.mxu0 0.0
    %353 = vmatprep.subr.mxu0 0.0
    %354 = vmatpush1.msra.mxu0 0.0
    %355 = vmatprep.subr.mxu0 0.0
    %356 = vmatpush1.msra.mxu0 0.0
    %357 = vmatprep.subr.mxu0 0.0
    %358 = vmatpush1.msra.mxu0 0.0
    %359 = vmatprep.subr.mxu0 0.0
    %360 = vmatpush1.msra.mxu0 0.0
    %361 = vmatprep.mubr.f32.mxu0 0.0
    %362 = vmatmul.mubr.f32.gmra.mrb[0].mxu0 %v296
    %v363 = vpop.f32.mrb[0].mxu0
    %v364 = vadd.f32 %v74, %v363
    %v365 = vpop.f32.mrb[0].mxu0
    %366 = vdwg.mxu0
    %v367 = vmax.f32 %v364, 0.0
    %v368 = vmul.f32 %v367, %v75
    %vm369 = vcmask 1041408
    %v370 = vsel %vm369, %v368, 0.0
    %371 = vadd.xlane.f32.xlu0 %v370
    %v372 = vpop.xlane.xlu0 %371
    %vm373 = vcmask 1024
    %374 = vst.msk [vmem:[%s3] sm:$0x3] %vm373, %v372
    // Predicated region
    $region18: #{outter_model_forward.1} parent=1 // pred_check
      _
    $region19: #{outter_model_forward.1} parent=1 // pred_check_branch
      %376 = sbr.rel (0) target = $region21
    $region20: #{outter_model_forward.1} parent=1 // pred_region
      _
    $region21: #{outter_model_forward.1} parent=1 // pred_fallthru
      _
    // Predicated region
    $region22: #{outter_model_forward.1} parent=1 // pred_check
      _
    $region23: #{outter_model_forward.1} parent=1 // pred_check_branch
      %378 = sbr.rel (0) target = $region25
    $region24: #{outter_model_forward.1} parent=1 // pred_region
      _
    $region25: #{outter_model_forward.1} parent=1 // pred_fallthru
      _
    %379 = vsyncpa [#allocation3], 1

</llo_original>
